<compile_context>
chip_gen: v5e
topology: v5e:2x2
jax: 0.10.0
libtpu: 0.0.40
codegen_flags: <defaults>
</compile_context>

<pallas_src>
import functools

import jax
import jax.numpy as jnp
from jax import lax
from jax.experimental import pallas as pl
from jax.experimental.pallas import tpu as pltpu


_MXU_DTYPE = jnp.bfloat16


def _round_up(x, m):
    return (x + m - 1) // m * m


def _pick_tm(m, kp, cp, budget_bytes=8 << 20, tm_max=512):
    """Largest M-tile whose double-buffered working set stays well inside VMEM."""
    resident_w = 2 * kp * cp * 2                     # bf16 weights, constant index (2x buffered)
    # pass-2 dominates: im2col tile (bf16, 2x buffered) + f32 output tile (2x buffered)
    # + one f32 conv intermediate per row.
    per_row = 2 * (kp * 2) + 2 * (cp * 4) + cp * 4
    tm = (budget_bytes - resident_w) // per_row
    tm = max(8, min(tm_max, int(tm)))
    tm = min(tm, _round_up(m, 8))                    # don't pad M beyond one tile for tiny problems
    return max(8, (tm // 8) * 8)


# ---------- pass 1: conv (im2col matmul on the MXU) -> per-tile channel statistics ----------
def _stats_kernel(a_ref, w_ref, stats_ref):
    # a_ref: (tm, Kp) bf16 patches; w_ref: (Kp, Cp) bf16, resident across M tiles.
    conv = jnp.dot(a_ref[...], w_ref[...], preferred_element_type=jnp.float32)   # (tm, Cp) f32
    s = jnp.sum(conv, axis=0, keepdims=True)             # (1, Cp) channel sum
    ss = jnp.sum(conv * conv, axis=0, keepdims=True)     # (1, Cp) channel sum of squares
    stats_ref[...] = jnp.concatenate([s, ss], axis=0)[None]   # (1, 2, Cp)


# ---------- pass 2: recompute conv + folded BatchNorm (single FMA) + ReLU ----------
def _conv_bn_relu_kernel(a_ref, w_ref, scale_ref, shift_ref, o_ref):
    conv = jnp.dot(a_ref[...], w_ref[...], preferred_element_type=jnp.float32)   # (tm, Cp) f32
    # scale/shift are resident (1, Cp) rows (constant index_map); broadcast FMA + ReLU on the VPU.
    o_ref[...] = jnp.maximum(conv * scale_ref[...] + shift_ref[...], 0.0)


@functools.partial(jax.jit, static_argnames=("stride", "padding", "dilation", "eps", "tm"))
def conv2d_bn_relu(x_nchw, weight, bias, gamma, beta, *,
                   stride=1, padding=0, dilation=1, eps=1e-5, tm=None):
    """Matches PyTorch Conv2dBnRelu.forward (freshly-constructed module, training-mode BN)."""
    # The conv bias is a per-channel constant; training-mode BN subtracts the batch mean,
    # so it cancels exactly.  (Keep it if this ever switches to eval-mode BN.)
    del bias

    N, Cin, H, W = x_nchw.shape
    Cout, Cin_w, KH, KW = weight.shape
    assert Cin == Cin_w

    # --- glue (runs under jit, fused by XLA): NCHW -> NHWC, pad, im2col (kh, kw, cin) columns ---
    # TODO(synk): im2col re-reads the input KH*KW times through HBM; a fully fused variant
    # would make (kh, kw) a reduction grid axis whose index_map offsets into the padded NHWC input.
    x = jnp.transpose(x_nchw, (0, 2, 3, 1)).astype(jnp.float32)        # NHWC
    if padding > 0:
        x = jnp.pad(x, ((0, 0), (padding, padding), (padding, padding), (0, 0)))
    Hp, Wp = x.shape[1], x.shape[2]
    OH = (Hp - dilation * (KH - 1) - 1) // stride + 1
    OW = (Wp - dilation * (KW - 1) - 1) // stride + 1

    patches = []
    for kh in range(KH):
        for kw in range(KW):
            hs, ws = kh * dilation, kw * dilation
            patches.append(x[:, hs:hs + stride * (OH - 1) + 1:stride,
                              ws:ws + stride * (OW - 1) + 1:stride, :])
    a = jnp.concatenate(patches, axis=-1).reshape(N * OH * OW, KH * KW * Cin)

    M, K = a.shape
    Kp = _round_up(K, 128)            # lane-dense contraction dim (MXU occupancy)
    Cp = _round_up(Cout, 128)         # lane-dense output dim (unmasked vst)
    if tm is None:
        tm = _pick_tm(M, Kp, Cp)
    Mp = _round_up(M, tm)
    num_tiles = Mp // tm

    # Zero-pad rows/cols: padded rows/cols contribute exactly 0 to the matmul and to the stats.
    a_p = jnp.zeros((Mp, Kp), jnp.float32).at[:M, :K].set(a).astype(_MXU_DTYPE)
    w_mat = jnp.transpose(weight, (2, 3, 1, 0)).reshape(K, Cout).astype(jnp.float32)
    w_p = jnp.zeros((Kp, Cp), jnp.float32).at[:K, :Cout].set(w_mat).astype(_MXU_DTYPE)

    # --- pass 1: per-tile channel statistics (no conv writeback) ---
    stats = pl.pallas_call(
        _stats_kernel,
        out_shape=jax.ShapeDtypeStruct((num_tiles, 2, Cp), jnp.float32),
        grid=(num_tiles,),
        in_specs=[
            pl.BlockSpec((tm, Kp), lambda i: (i, 0)),
            pl.BlockSpec((Kp, Cp), lambda i: (0, 0)),      # weights resident in VMEM
        ],
        out_specs=pl.BlockSpec((1, 2, Cp), lambda i: (i, 0, 0)),
        compiler_params=pltpu.CompilerParams(
            dimension_semantics=("parallel",)),
    )(a_p, w_p)

    # --- tiny glue: global batch stats -> folded BN (scale, shift) per channel ---
    sum_c = jnp.sum(stats[:, 0, :], axis=0)                # (Cp,)
    ssq_c = jnp.sum(stats[:, 1, :], axis=0)                # (Cp,)
    mean = sum_c / M                                       # divide by true M (pad rows are all-zero)
    var = jnp.maximum(ssq_c / M - mean * mean, 0.0)        # biased variance (PyTorch normalization)
    g_p = jnp.zeros((Cp,), jnp.float32).at[:Cout].set(gamma.astype(jnp.float32))
    b_p = jnp.zeros((Cp,), jnp.float32).at[:Cout].set(beta.astype(jnp.float32))
    scale_row = g_p * lax.rsqrt(var + eps)
    scale = scale_row.reshape(1, Cp)
    shift = (b_p - mean * scale_row).reshape(1, Cp)

    # --- pass 2: recompute conv tile, then y = max(conv * scale + shift, 0) ---
    out_flat = pl.pallas_call(
        _conv_bn_relu_kernel,
        out_shape=jax.ShapeDtypeStruct((Mp, Cp), jnp.float32),
        grid=(num_tiles,),
        in_specs=[
            pl.BlockSpec((tm, Kp), lambda i: (i, 0)),
            pl.BlockSpec((Kp, Cp), lambda i: (0, 0)),      # weights resident in VMEM
            pl.BlockSpec((1, Cp), lambda i: (0, 0)),
            pl.BlockSpec((1, Cp), lambda i: (0, 0)),
        ],
        out_specs=pl.BlockSpec((tm, Cp), lambda i: (i, 0)),
        compiler_params=pltpu.CompilerParams(
            dimension_semantics=("parallel",)),
    )(a_p, w_p, scale, shift)

    # --- glue: slice off padding, back to NCHW ---
    out = out_flat[:M, :Cout].reshape(N, OH, OW, Cout)
    return jnp.transpose(out, (0, 3, 1, 2))


def _reference(x_nchw, weight, bias, gamma, beta, *, stride, padding, dilation, eps):
    """Pure-JAX f32 reference (conv + training-mode BN + ReLU) for correctness checking."""
    conv = lax.conv_general_dilated(
        x_nchw.astype(jnp.float32), weight.astype(jnp.float32),
        window_strides=(stride, stride),
        padding=[(padding, padding), (padding, padding)],
        rhs_dilation=(dilation, dilation),
        dimension_numbers=("NCHW", "OIHW", "NCHW"),
    ) + bias.reshape(1, -1, 1, 1)
    mean = jnp.mean(conv, axis=(0, 2, 3), keepdims=True)
    var = jnp.mean((conv - mean) ** 2, axis=(0, 2, 3), keepdims=True)
    xhat = (conv - mean) * lax.rsqrt(var + eps)
    y = xhat * gamma.reshape(1, -1, 1, 1) + beta.reshape(1, -1, 1, 1)
    return jnp.maximum(y, 0.0)


if __name__ == "__main__":
    # Module hyperparameters (PyTorch defaults of Conv2dBnRelu): k=3, stride=1, padding=0,
    # dilation=1, bias=True.
    N, Cin, H, W = 2, 4, 16, 16
    Cout, KH, KW = 8, 3, 3
    stride, padding, dilation, eps = 1, 0, 1, 1e-5

    key = jax.random.PRNGKey(0)
    kx, kw, kb = jax.random.split(key, 3)
    x = jax.random.normal(kx, (N, Cin, H, W), dtype=jnp.float32)
    weight = jax.random.normal(kw, (Cout, Cin, KH, KW), dtype=jnp.float32) * 0.1
    bias = jax.random.normal(kb, (Cout,), dtype=jnp.float32) * 0.1
    gamma = jnp.ones((Cout,), dtype=jnp.float32)   # BatchNorm2d default weight
    beta = jnp.zeros((Cout,), dtype=jnp.float32)   # BatchNorm2d default bias

    out = conv2d_bn_relu(x, weight, bias, gamma, beta,
                         stride=stride, padding=padding, dilation=dilation, eps=eps)
    out = jax.block_until_ready(out)

    ref = _reference(x, weight, bias, gamma, beta,
                     stride=stride, padding=padding, dilation=dilation, eps=eps)
    assert out.shape == (N, Cout, H - KH + 1, W - KW + 1)
    # bf16 MXU inputs (f32 accumulation) => looser tolerance than a pure-f32 conv.
    max_err = float(jnp.max(jnp.abs(out - ref)))
    mean_err = float(jnp.mean(jnp.abs(out - ref)))
    assert jnp.allclose(out, ref, atol=5e-2, rtol=5e-2), (max_err, mean_err)
    assert mean_err < 1e-2, (max_err, mean_err)

    print("KERNEL_OK")
</pallas_src>

<mosaic_0001>
module attributes {stable_mosaic.version = 11 : i64} {
  func.func @_stats_kernel(%arg0: i32, %arg1: memref<392x128xbf16, #tpu.memory_space<vmem>>, %arg2: memref<128x128xbf16, #tpu.memory_space<vmem>>, %arg3: memref<1x2x128xf32, #tpu.memory_space<vmem>>) attributes {dimension_semantics = [#tpu.dimension_semantics<parallel>], iteration_bounds = array<i64: 1>, scalar_prefetch = 0 : i64, scratch_operands = 0 : i64, tpu.core_type = #tpu.core_type<tc>, window_params = [{transform_indices = @transform_0, window_bounds = array<i64: 392, 128>}, {pipeline_mode = #tpu.pipeline_mode<synchronous>, transform_indices = @transform_1, window_bounds = array<i64: 128, 128>}, {transform_indices = @transform_2, window_bounds = array<i64: 1, 2, 128>}]} {
    %c0 = arith.constant 0 : index
    %c0_0 = arith.constant 0 : index
    %0 = vector.load %arg1[%c0, %c0_0] : memref<392x128xbf16, #tpu.memory_space<vmem>>, vector<392x128xbf16>
    %c0_1 = arith.constant 0 : index
    %c0_2 = arith.constant 0 : index
    %1 = vector.load %arg2[%c0_1, %c0_2] : memref<128x128xbf16, #tpu.memory_space<vmem>>, vector<128x128xbf16>
    %cst = arith.constant dense<0.000000e+00> : vector<392x128xf32>
    %2 = tpu.matmul %0, %1, %cst {dimension_numbers = #tpu.dot_dimension_numbers<[1], [0], [0], [1], [0, 0, 1, 1], [], []>} : vector<392x128xbf16>, vector<128x128xbf16>, vector<392x128xf32> -> vector<392x128xf32>
    %cst_3 = arith.constant dense<0.000000e+00> : vector<128xf32>
    %3 = vector.multi_reduction <add>, %2, %cst_3 [0] : vector<392x128xf32> to vector<128xf32>
    %4 = vector.shape_cast %3 : vector<128xf32> to vector<1x128xf32>
    %5 = arith.mulf %2, %2 : vector<392x128xf32>
    %cst_4 = arith.constant dense<0.000000e+00> : vector<128xf32>
    %6 = vector.multi_reduction <add>, %5, %cst_4 [0] : vector<392x128xf32> to vector<128xf32>
    %7 = vector.shape_cast %6 : vector<128xf32> to vector<1x128xf32>
    %8 = tpu.concatenate %4, %7 in 0 : vector<1x128xf32>, vector<1x128xf32> -> vector<2x128xf32>
    %9 = vector.shape_cast %8 : vector<2x128xf32> to vector<1x2x128xf32>
    %c0_5 = arith.constant 0 : index
    %c0_6 = arith.constant 0 : index
    %c0_7 = arith.constant 0 : index
    %10 = vector.load %arg3[%c0_5, %c0_6, %c0_7] : memref<1x2x128xf32, #tpu.memory_space<vmem>>, vector<1x2x128xf32>
    tpu.vector_store %arg3[%c0_5, %c0_6, %c0_7], %9 {strides = array<i32>} : memref<1x2x128xf32, #tpu.memory_space<vmem>>, vector<1x2x128xf32>,
    return
  }
  func.func @transform_0(%arg0: i32) -> (i32, i32) {
    %c0_i32 = arith.constant 0 : i32
    %c0_i32_0 = arith.constant 0 : i32
    return %arg0, %c0_i32 : i32, i32
  }
  func.func @transform_1(%arg0: i32) -> (i32, i32) {
    %c0_i32 = arith.constant 0 : i32
    %c0_i32_0 = arith.constant 0 : i32
    %c0_i32_1 = arith.constant 0 : i32
    return %c0_i32, %c0_i32_0 : i32, i32
  }
  func.func @transform_2(%arg0: i32) -> (i32, i32, i32) {
    %c0_i32 = arith.constant 0 : i32
    %c0_i32_0 = arith.constant 0 : i32
    %c0_i32_1 = arith.constant 0 : i32
    return %arg0, %c0_i32, %c0_i32_0 : i32, i32, i32
  }
}

module attributes {stable_mosaic.version = 11 : i64} {
  func.func @_conv_bn_relu_kernel(%arg0: i32, %arg1: memref<392x128xbf16, #tpu.memory_space<vmem>>, %arg2: memref<128x128xbf16, #tpu.memory_space<vmem>>, %arg3: memref<1x128xf32, #tpu.memory_space<vmem>>, %arg4: memref<1x128xf32, #tpu.memory_space<vmem>>, %arg5: memref<392x128xf32, #tpu.memory_space<vmem>>) attributes {dimension_semantics = [#tpu.dimension_semantics<parallel>], iteration_bounds = array<i64: 1>, scalar_prefetch = 0 : i64, scratch_operands = 0 : i64, tpu.core_type = #tpu.core_type<tc>, window_params = [{transform_indices = @transform_0, window_bounds = array<i64: 392, 128>}, {pipeline_mode = #tpu.pipeline_mode<synchronous>, transform_indices = @transform_1, window_bounds = array<i64: 128, 128>}, {pipeline_mode = #tpu.pipeline_mode<synchronous>, transform_indices = @transform_2, window_bounds = array<i64: 1, 128>}, {pipeline_mode = #tpu.pipeline_mode<synchronous>, transform_indices = @transform_3, window_bounds = array<i64: 1, 128>}, {transform_indices = @transform_4, window_bounds = array<i64: 392, 128>}]} {
    %c0 = arith.constant 0 : index
    %c0_0 = arith.constant 0 : index
    %0 = vector.load %arg1[%c0, %c0_0] : memref<392x128xbf16, #tpu.memory_space<vmem>>, vector<392x128xbf16>
    %c0_1 = arith.constant 0 : index
    %c0_2 = arith.constant 0 : index
    %1 = vector.load %arg2[%c0_1, %c0_2] : memref<128x128xbf16, #tpu.memory_space<vmem>>, vector<128x128xbf16>
    %cst = arith.constant dense<0.000000e+00> : vector<392x128xf32>
    %2 = tpu.matmul %0, %1, %cst {dimension_numbers = #tpu.dot_dimension_numbers<[1], [0], [0], [1], [0, 0, 1, 1], [], []>} : vector<392x128xbf16>, vector<128x128xbf16>, vector<392x128xf32> -> vector<392x128xf32>
    %c0_3 = arith.constant 0 : index
    %c0_4 = arith.constant 0 : index
    %3 = vector.load %arg3[%c0_3, %c0_4] : memref<1x128xf32, #tpu.memory_space<vmem>>, vector<1x128xf32>
    %4 = vector.broadcast %3 : vector<1x128xf32> to vector<392x128xf32>
    %5 = arith.mulf %2, %4 : vector<392x128xf32>
    %c0_5 = arith.constant 0 : index
    %c0_6 = arith.constant 0 : index
    %6 = vector.load %arg4[%c0_5, %c0_6] : memref<1x128xf32, #tpu.memory_space<vmem>>, vector<1x128xf32>
    %7 = vector.broadcast %6 : vector<1x128xf32> to vector<392x128xf32>
    %8 = arith.addf %5, %7 : vector<392x128xf32>
    %cst_7 = arith.constant 0.000000e+00 : f32
    %9 = vector.broadcast %cst_7 : f32 to vector<392x128xf32>
    %10 = arith.maximumf %8, %9 : vector<392x128xf32>
    %c0_8 = arith.constant 0 : index
    %c0_9 = arith.constant 0 : index
    %11 = vector.load %arg5[%c0_8, %c0_9] : memref<392x128xf32, #tpu.memory_space<vmem>>, vector<392x128xf32>
    tpu.vector_store %arg5[%c0_8, %c0_9], %10 {strides = array<i32>} : memref<392x128xf32, #tpu.memory_space<vmem>>, vector<392x128xf32>,
    return
  }
  func.func @transform_0(%arg0: i32) -> (i32, i32) {
    %c0_i32 = arith.constant 0 : i32
    %c0_i32_0 = arith.constant 0 : i32
    return %arg0, %c0_i32 : i32, i32
  }
  func.func @transform_1(%arg0: i32) -> (i32, i32) {
    %c0_i32 = arith.constant 0 : i32
    %c0_i32_0 = arith.constant 0 : i32
    %c0_i32_1 = arith.constant 0 : i32
    return %c0_i32, %c0_i32_0 : i32, i32
  }
  func.func @transform_2(%arg0: i32) -> (i32, i32) {
    %c0_i32 = arith.constant 0 : i32
    %c0_i32_0 = arith.constant 0 : i32
    %c0_i32_1 = arith.constant 0 : i32
    return %c0_i32, %c0_i32_0 : i32, i32
  }
  func.func @transform_3(%arg0: i32) -> (i32, i32) {
    %c0_i32 = arith.constant 0 : i32
    %c0_i32_0 = arith.constant 0 : i32
    %c0_i32_1 = arith.constant 0 : i32
    return %c0_i32, %c0_i32_0 : i32, i32
  }
  func.func @transform_4(%arg0: i32) -> (i32, i32) {
    %c0_i32 = arith.constant 0 : i32
    %c0_i32_0 = arith.constant 0 : i32
    return %arg0, %c0_i32 : i32, i32
  }
}

</mosaic_0001>

<llo_original>
// kernel: conv2d_bn_relu.2
$region0: #{conv2d_bn_relu.2}
  #allocation0 [shape = 'u32[]', space=smem, size = 0x4, offset = 0x4, fixed_abs, tag = 'smem constant byte address 0x4 - core index']
  #allocation1 [shape = 'u32[72,128]{1,0:T(1,128)}', space=vmem, size = 0x9000, scoped, tag = 'internal scratch']
  %s0 = inlined_call_operand.vmem [shape: bf16[392,128], index: 0, kind: input, shape index: {}]
  %s1 = inlined_call_operand.vmem [shape: bf16[128,128], index: 1, kind: input, shape index: {}]
  %s2 = inlined_call_operand.vmem [shape: f32[1,2,128], index: 2, kind: output, shape index: {}]
  %s3 = sld [smem:[#allocation0]]
  $region18: #{conv2d_bn_relu.2} parent=0
    _
  %s5 = ssub.s32 1, %s3
  %s6 = scalar_select 0, %s5, %s3
  // Predicated region
  $region2: #{conv2d_bn_relu.2} parent=0 // pred_check
    _
  $region3: #{conv2d_bn_relu.2} parent=0 // pred_check_branch
    %8 = sbr.rel (0) target = $region5
  $region4: #{conv2d_bn_relu.2} parent=0 // pred_region
    _
  $region5: #{conv2d_bn_relu.2} parent=0 // pred_fallthru
    _
  // Predicated region
  $region6: #{conv2d_bn_relu.2} parent=0 // pred_check
    _
  $region7: #{conv2d_bn_relu.2} parent=0 // pred_check_branch
    %10 = sbr.rel (0) target = $region9
  $region8: #{conv2d_bn_relu.2} parent=0 // pred_region
    _
  $region9: #{conv2d_bn_relu.2} parent=0 // pred_fallthru
    _
  %v11 = vld [vmem:[%s0] sm:$0xf]
  %v12 = vld [vmem:[%s0 + $0x4] sm:$0xf]
  %v13 = vld [vmem:[%s0 + $0x8] sm:$0xf]
  %v14 = vld [vmem:[%s0 + $0xc] sm:$0xf]
  %v15 = vld [vmem:[%s0 + $0x10] sm:$0xf]
  %v16 = vld [vmem:[%s0 + $0x14] sm:$0xf]
  %v17 = vld [vmem:[%s0 + $0x18] sm:$0xf]
  %v18 = vld [vmem:[%s0 + $0x1c] sm:$0xf]
  %v19 = vld [vmem:[%s0 + $0x20] sm:$0xf]
  %v20 = vld [vmem:[%s0 + $0x24] sm:$0xf]
  %v21 = vld [vmem:[%s0 + $0x28] sm:$0xf]
  %v22 = vld [vmem:[%s0 + $0x2c] sm:$0xf]
  %v23 = vld [vmem:[%s0 + $0x30] sm:$0xf]
  %v24 = vld [vmem:[%s0 + $0x34] sm:$0xf]
  %v25 = vld [vmem:[%s0 + $0x38] sm:$0xf]
  %v26 = vld [vmem:[%s0 + $0x3c] sm:$0xf]
  %v27 = vld [vmem:[%s0 + $0x40] sm:$0xf]
  %v28 = vld [vmem:[%s0 + $0x44] sm:$0xf]
  %v29 = vld [vmem:[%s0 + $0x48] sm:$0xf]
  %v30 = vld [vmem:[%s0 + $0x4c] sm:$0xf]
  %v31 = vld [vmem:[%s0 + $0x50] sm:$0xf]
  %v32 = vld [vmem:[%s0 + $0x54] sm:$0xf]
  %v33 = vld [vmem:[%s0 + $0x58] sm:$0xf]
  %v34 = vld [vmem:[%s0 + $0x5c] sm:$0xf]
  %v35 = vld [vmem:[%s0 + $0x60] sm:$0xf]
  %v36 = vld [vmem:[%s0 + $0x64] sm:$0xf]
  %v37 = vld [vmem:[%s0 + $0x68] sm:$0xf]
  %v38 = vld [vmem:[%s0 + $0x6c] sm:$0xf]
  %v39 = vld [vmem:[%s0 + $0x70] sm:$0xf]
  %v40 = vld [vmem:[%s0 + $0x74] sm:$0xf]
  %v41 = vld [vmem:[%s0 + $0x78] sm:$0xf]
  %v42 = vld [vmem:[%s0 + $0x7c] sm:$0xf]
  %v43 = vld [vmem:[%s0 + $0x80] sm:$0xf]
  %v44 = vld [vmem:[%s0 + $0x84] sm:$0xf]
  %v45 = vld [vmem:[%s0 + $0x88] sm:$0xf]
  %v46 = vld [vmem:[%s0 + $0x8c] sm:$0xf]
  %v47 = vld [vmem:[%s0 + $0x90] sm:$0xf]
  %v48 = vld [vmem:[%s0 + $0x94] sm:$0xf]
  %v49 = vld [vmem:[%s0 + $0x98] sm:$0xf]
  %v50 = vld [vmem:[%s0 + $0x9c] sm:$0xf]
  %v51 = vld [vmem:[%s0 + $0xa0] sm:$0xf]
  %v52 = vld [vmem:[%s0 + $0xa4] sm:$0xf]
  %v53 = vld [vmem:[%s0 + $0xa8] sm:$0xf]
  %v54 = vld [vmem:[%s0 + $0xac] sm:$0xf]
  %v55 = vld [vmem:[%s0 + $0xb0] sm:$0xf]
  %v56 = vld [vmem:[%s0 + $0xb4] sm:$0xf]
  %v57 = vld [vmem:[%s0 + $0xb8] sm:$0xf]
  %v58 = vld [vmem:[%s0 + $0xbc] sm:$0xf]
  %v59 = vld [vmem:[%s0 + $0xc0] sm:$0xf]
  %v60 = vld [vmem:[%s1] sm:$0xf]
  %v61 = vld [vmem:[%s1 + $0x4] sm:$0xf]
  %v62 = vld [vmem:[%s1 + $0x8] sm:$0xf]
  %v63 = vld [vmem:[%s1 + $0xc] sm:$0xf]
  %v64 = vld [vmem:[%s1 + $0x10] sm:$0xf]
  %v65 = vld [vmem:[%s1 + $0x14] sm:$0xf]
  %v66 = vld [vmem:[%s1 + $0x18] sm:$0xf]
  %v67 = vld [vmem:[%s1 + $0x1c] sm:$0xf]
  %v68 = vld [vmem:[%s1 + $0x20] sm:$0xf]
  %v69 = vld [vmem:[%s1 + $0x24] sm:$0xf]
  %v70 = vld [vmem:[%s1 + $0x28] sm:$0xf]
  %v71 = vld [vmem:[%s1 + $0x2c] sm:$0xf]
  %v72 = vld [vmem:[%s1 + $0x30] sm:$0xf]
  %v73 = vld [vmem:[%s1 + $0x34] sm:$0xf]
  %v74 = vld [vmem:[%s1 + $0x38] sm:$0xf]
  %v75 = vld [vmem:[%s1 + $0x3c] sm:$0xf]
  %v125 = vunpack.c.l.b16 %v11
  %v126 = vunpack.c.l.b16 %v12
  %v127 = vunpack.c.l.b16 %v13
  %v128 = vunpack.c.l.b16 %v14
  %v129 = vunpack.c.l.b16 %v15
  %v130 = vunpack.c.l.b16 %v16
  %v131 = vunpack.c.l.b16 %v17
  %v132 = vunpack.c.l.b16 %v18
  %v133 = vunpack.c.l.b16 %v19
  %v134 = vunpack.c.l.b16 %v20
  %v135 = vunpack.c.l.b16 %v21
  %v136 = vunpack.c.l.b16 %v22
  %v137 = vunpack.c.l.b16 %v23
  %v138 = vunpack.c.l.b16 %v24
  %v139 = vunpack.c.l.b16 %v25
  %v140 = vunpack.c.l.b16 %v26
  %v141 = vunpack.c.l.b16 %v27
  %v142 = vunpack.c.l.b16 %v28
  %v143 = vunpack.c.l.b16 %v29
  %v144 = vunpack.c.l.b16 %v30
  %v145 = vunpack.c.l.b16 %v31
  %v146 = vunpack.c.l.b16 %v32
  %v147 = vunpack.c.l.b16 %v33
  %v148 = vunpack.c.l.b16 %v34
  %v149 = vunpack.c.l.b16 %v35
  %v150 = vunpack.c.l.b16 %v36
  %v151 = vunpack.c.l.b16 %v37
  %v152 = vunpack.c.l.b16 %v38
  %v153 = vunpack.c.l.b16 %v39
  %v154 = vunpack.c.l.b16 %v40
  %v155 = vunpack.c.l.b16 %v41
  %v156 = vunpack.c.l.b16 %v42
  %v157 = vunpack.c.l.b16 %v43
  %v158 = vunpack.c.l.b16 %v44
  %v159 = vunpack.c.l.b16 %v45
  %v160 = vunpack.c.l.b16 %v46
  %v161 = vunpack.c.l.b16 %v47
  %v162 = vunpack.c.l.b16 %v48
  %v163 = vunpack.c.l.b16 %v49
  %v164 = vunpack.c.l.b16 %v50
  %v165 = vunpack.c.l.b16 %v51
  %v166 = vunpack.c.l.b16 %v52
  %v167 = vunpack.c.l.b16 %v53
  %v168 = vunpack.c.l.b16 %v54
  %v169 = vunpack.c.l.b16 %v55
  %v170 = vunpack.c.l.b16 %v56
  %v171 = vunpack.c.l.b16 %v57
  %v172 = vunpack.c.l.b16 %v58
  %v173 = vunpack.c.l.b16 %v59
  %v174 = vpack.c.b16 %v126, %v125
  %v175 = vpack.c.b16 %v128, %v127
  %v176 = vpack.c.b16 %v130, %v129
  %v177 = vpack.c.b16 %v132, %v131
  %v178 = vpack.c.b16 %v134, %v133
  %v179 = vpack.c.b16 %v136, %v135
  %v180 = vpack.c.b16 %v138, %v137
  %v181 = vpack.c.b16 %v140, %v139
  %v182 = vpack.c.b16 %v142, %v141
  %v183 = vpack.c.b16 %v144, %v143
  %v184 = vpack.c.b16 %v146, %v145
  %v185 = vpack.c.b16 %v148, %v147
  %v186 = vpack.c.b16 %v150, %v149
  %v187 = vpack.c.b16 %v152, %v151
  %v188 = vpack.c.b16 %v154, %v153
  %v189 = vpack.c.b16 %v156, %v155
  %v190 = vpack.c.b16 %v158, %v157
  %v191 = vpack.c.b16 %v160, %v159
  %v192 = vpack.c.b16 %v162, %v161
  %v193 = vpack.c.b16 %v164, %v163
  %v194 = vpack.c.b16 %v166, %v165
  %v195 = vpack.c.b16 %v168, %v167
  %v196 = vpack.c.b16 %v170, %v169
  %v197 = vpack.c.b16 %v172, %v171
  %v198 = vpack.c.b16 %v173, %v173
  %v240 = vunpack.c.l.b16 %v60
  %v241 = vunpack.c.l.b16 %v61
  %v242 = vunpack.c.l.b16 %v62
  %v243 = vunpack.c.l.b16 %v63
  %v244 = vunpack.c.l.b16 %v64
  %v245 = vunpack.c.l.b16 %v65
  %v246 = vunpack.c.l.b16 %v66
  %v247 = vunpack.c.l.b16 %v67
  %v248 = vunpack.c.l.b16 %v68
  %v249 = vunpack.c.l.b16 %v69
  %v250 = vunpack.c.l.b16 %v70
  %v251 = vunpack.c.l.b16 %v71
  %v252 = vunpack.c.l.b16 %v72
  %v253 = vunpack.c.l.b16 %v73
  %v254 = vunpack.c.l.b16 %v74
  %v255 = vunpack.c.l.b16 %v75
  %v256 = vpack.c.b16 %v241, %v240
  %v257 = vpack.c.b16 %v243, %v242
  %v258 = vpack.c.b16 %v245, %v244
  %v259 = vpack.c.b16 %v247, %v246
  %v260 = vpack.c.b16 %v249, %v248
  %v261 = vpack.c.b16 %v251, %v250
  %v262 = vpack.c.b16 %v253, %v252
  %v263 = vpack.c.b16 %v255, %v254
  %272 = vmatpush.bf16.msra.mxu0 %v263
  %273 = vmatpush.bf16.msra.mxu0 %v262
  %274 = vmatpush.bf16.msra.mxu0 %v261
  %275 = vmatpush.bf16.msra.mxu0 %v260
  %276 = vmatpush.bf16.msra.mxu0 %v259
  %277 = vmatpush.bf16.msra.mxu0 %v258
  %278 = vmatpush.bf16.msra.mxu0 %v257
  %279 = vmatpush.bf16.msra.mxu0 %v256
  %280 = vmatmul.bf16.gmra.mxu0 %v174
  %v281 = vpop.f32.mrf.mxu0
  %v282 = vadd.f32 0.0, %v281
  %v283 = vpop.f32.mrf.mxu0
  %v284 = vadd.f32 0.0, %v283
  %285 = vmatmul.bf16.gmra.mxu0 %v175
  %v286 = vpop.f32.mrf.mxu0
  %v287 = vadd.f32 0.0, %v286
  %v288 = vpop.f32.mrf.mxu0
  %v289 = vadd.f32 0.0, %v288
  %290 = vmatmul.bf16.gmra.mxu0 %v176
  %v291 = vpop.f32.mrf.mxu0
  %v292 = vadd.f32 0.0, %v291
  %v293 = vpop.f32.mrf.mxu0
  %v294 = vadd.f32 0.0, %v293
  %295 = vmatmul.bf16.gmra.mxu0 %v177
  %v296 = vpop.f32.mrf.mxu0
  %v297 = vadd.f32 0.0, %v296
  %v298 = vpop.f32.mrf.mxu0
  %v299 = vadd.f32 0.0, %v298
  %300 = vmatmul.bf16.gmra.mxu0 %v178
  %v301 = vpop.f32.mrf.mxu0
  %v302 = vadd.f32 0.0, %v301
  %v303 = vpop.f32.mrf.mxu0
  %v304 = vadd.f32 0.0, %v303
  %305 = vmatmul.bf16.gmra.mxu0 %v179
  %v306 = vpop.f32.mrf.mxu0
  %v307 = vadd.f32 0.0, %v306
  %v308 = vpop.f32.mrf.mxu0
  %v309 = vadd.f32 0.0, %v308
  %310 = vmatmul.bf16.gmra.mxu0 %v180
  %v311 = vpop.f32.mrf.mxu0
  %v312 = vadd.f32 0.0, %v311
  %v313 = vpop.f32.mrf.mxu0
  %v314 = vadd.f32 0.0, %v313
  %315 = vmatmul.bf16.gmra.mxu0 %v181
  %v316 = vpop.f32.mrf.mxu0
  %v317 = vadd.f32 0.0, %v316
  %v318 = vpop.f32.mrf.mxu0
  %v319 = vadd.f32 0.0, %v318
  %320 = vmatmul.bf16.gmra.mxu0 %v182
  %v321 = vpop.f32.mrf.mxu0
  %v322 = vadd.f32 0.0, %v321
  %v323 = vpop.f32.mrf.mxu0
  %v324 = vadd.f32 0.0, %v323
  %325 = vmatmul.bf16.gmra.mxu0 %v183
  %v326 = vpop.f32.mrf.mxu0
  %v327 = vadd.f32 0.0, %v326
  %v328 = vpop.f32.mrf.mxu0
  %v329 = vadd.f32 0.0, %v328
  %330 = vmatmul.bf16.gmra.mxu0 %v184
  %v331 = vpop.f32.mrf.mxu0
  %v332 = vadd.f32 0.0, %v331
  %v333 = vpop.f32.mrf.mxu0
  %v334 = vadd.f32 0.0, %v333
  %335 = vmatmul.bf16.gmra.mxu0 %v185
  %v336 = vpop.f32.mrf.mxu0
  %v337 = vadd.f32 0.0, %v336
  %v338 = vpop.f32.mrf.mxu0
  %v339 = vadd.f32 0.0, %v338
  %340 = vmatmul.bf16.gmra.mxu0 %v186
  %v341 = vpop.f32.mrf.mxu0
  %v342 = vadd.f32 0.0, %v341
  %v343 = vpop.f32.mrf.mxu0
  %v344 = vadd.f32 0.0, %v343
  %345 = vmatmul.bf16.gmra.mxu0 %v187
  %v346 = vpop.f32.mrf.mxu0
  %v347 = vadd.f32 0.0, %v346
  %v348 = vpop.f32.mrf.mxu0
  %v349 = vadd.f32 0.0, %v348
  %350 = vmatmul.bf16.gmra.mxu0 %v188
  %v351 = vpop.f32.mrf.mxu0
  %v352 = vadd.f32 0.0, %v351
  %v353 = vpop.f32.mrf.mxu0
  %v354 = vadd.f32 0.0, %v353
  %355 = vmatmul.bf16.gmra.mxu0 %v189
  %v356 = vpop.f32.mrf.mxu0
  %v357 = vadd.f32 0.0, %v356
  %v358 = vpop.f32.mrf.mxu0
  %v359 = vadd.f32 0.0, %v358
  %360 = vmatmul.bf16.gmra.mxu0 %v190
  %v361 = vpop.f32.mrf.mxu0
  %v362 = vadd.f32 0.0, %v361
  %v363 = vpop.f32.mrf.mxu0
  %v364 = vadd.f32 0.0, %v363
  %365 = vmatmul.bf16.gmra.mxu0 %v191
  %v366 = vpop.f32.mrf.mxu0
  %v367 = vadd.f32 0.0, %v366
  %v368 = vpop.f32.mrf.mxu0
  %v369 = vadd.f32 0.0, %v368
  %370 = vmatmul.bf16.gmra.mxu0 %v192
  %v371 = vpop.f32.mrf.mxu0
  %v372 = vadd.f32 0.0, %v371
  %v373 = vpop.f32.mrf.mxu0
  %v374 = vadd.f32 0.0, %v373
  %375 = vmatmul.bf16.gmra.mxu0 %v193
  %v376 = vpop.f32.mrf.mxu0
  %v377 = vadd.f32 0.0, %v376
  %v378 = vpop.f32.mrf.mxu0
  %v379 = vadd.f32 0.0, %v378
  %380 = vmatmul.bf16.gmra.mxu0 %v194
  %v381 = vpop.f32.mrf.mxu0
  %v382 = vadd.f32 0.0, %v381
  %v383 = vpop.f32.mrf.mxu0
  %v384 = vadd.f32 0.0, %v383
  %385 = vmatmul.bf16.gmra.mxu0 %v195
  %v386 = vpop.f32.mrf.mxu0
  %v387 = vadd.f32 0.0, %v386
  %v388 = vpop.f32.mrf.mxu0
  %v389 = vadd.f32 0.0, %v388
  %390 = vmatmul.bf16.gmra.mxu0 %v196
  %v391 = vpop.f32.mrf.mxu0
  %v392 = vadd.f32 0.0, %v391
  %v393 = vpop.f32.mrf.mxu0
  %v394 = vadd.f32 0.0, %v393
  %395 = vmatmul.bf16.gmra.mxu0 %v197
  %v396 = vpop.f32.mrf.mxu0
  %v397 = vadd.f32 0.0, %v396
  %v398 = vpop.f32.mrf.mxu0
  %v399 = vadd.f32 0.0, %v398
  %400 = vmatmul.bf16.gmra.mxu0 %v198
  %v401 = vpop.f32.mrf.mxu0
  %v402 = vadd.f32 0.0, %v401
  %v403 = vpop.f32.mrf.mxu0
  %404 = vdwg.mxu0
  %v405 = vadd.f32 %v282, %v284
  %v406 = vadd.f32 %v405, %v287
  %v407 = vadd.f32 %v406, %v289
  %v408 = vadd.f32 %v407, %v292
  %v409 = vadd.f32 %v408, %v294
  %v410 = vadd.f32 %v409, %v297
  %v411 = vadd.f32 %v410, %v299
  %v412 = vadd.f32 %v411, %v302
  %v413 = vadd.f32 %v412, %v304
  %v414 = vadd.f32 %v413, %v307
  %v415 = vadd.f32 %v414, %v309
  %v416 = vadd.f32 %v415, %v312
  %v417 = vadd.f32 %v416, %v314
  %v418 = vadd.f32 %v417, %v317
  %v419 = vadd.f32 %v418, %v319
  %v420 = vadd.f32 %v419, %v322
  %v421 = vadd.f32 %v420, %v324
  %v422 = vadd.f32 %v421, %v327
  %v423 = vadd.f32 %v422, %v329
  %v424 = vadd.f32 %v423, %v332
  %v425 = vadd.f32 %v424, %v334
  %v426 = vadd.f32 %v425, %v337
  %v427 = vadd.f32 %v426, %v339
  %v428 = vadd.f32 %v427, %v342
  %v429 = vadd.f32 %v428, %v344
  %v430 = vadd.f32 %v429, %v347
  %v431 = vadd.f32 %v430, %v349
  %v432 = vadd.f32 %v431, %v352
  %v433 = vadd.f32 %v432, %v354
  %v434 = vadd.f32 %v433, %v357
  %v435 = vadd.f32 %v434, %v359
  %v436 = vadd.f32 %v435, %v362
  %v437 = vadd.f32 %v436, %v364
  %v438 = vadd.f32 %v437, %v367
  %v439 = vadd.f32 %v438, %v369
  %v440 = vadd.f32 %v439, %v372
  %v441 = vadd.f32 %v440, %v374
  %v442 = vadd.f32 %v441, %v377
  %v443 = vadd.f32 %v442, %v379
  %v444 = vadd.f32 %v443, %v382
  %v445 = vadd.f32 %v444, %v384
  %v446 = vadd.f32 %v445, %v387
  %v447 = vadd.f32 %v446, %v389
  %v448 = vadd.f32 %v447, %v392
  %v449 = vadd.f32 %v448, %v394
  %v450 = vadd.f32 %v449, %v397
  %v451 = vadd.f32 %v450, %v399
  %v452 = vadd.f32 %v451, %v402
  %v453 = vrot.slane %v452, 4
  %v454 = vadd.f32 %v452, %v453
  %v455 = vrot.slane %v454, 2
  %v456 = vadd.f32 %v454, %v455
  %v457 = vrot.slane %v456, 1
  %v458 = vadd.f32 %v456, %v457
  %v459 = vmul.f32 %v282, %v282
  %v460 = vmul.f32 %v284, %v284
  %v461 = vmul.f32 %v287, %v287
  %v462 = vmul.f32 %v289, %v289
  %v463 = vmul.f32 %v292, %v292
  %v464 = vmul.f32 %v294, %v294
  %v465 = vmul.f32 %v297, %v297
  %v466 = vmul.f32 %v299, %v299
  %v467 = vmul.f32 %v302, %v302
  %v468 = vmul.f32 %v304, %v304
  %v469 = vmul.f32 %v307, %v307
  %v470 = vmul.f32 %v309, %v309
  %v471 = vmul.f32 %v312, %v312
  %v472 = vmul.f32 %v314, %v314
  %v473 = vmul.f32 %v317, %v317
  %v474 = vmul.f32 %v319, %v319
  %v475 = vmul.f32 %v322, %v322
  %v476 = vmul.f32 %v324, %v324
  %v477 = vmul.f32 %v327, %v327
  %v478 = vmul.f32 %v329, %v329
  %v479 = vmul.f32 %v332, %v332
  %v480 = vmul.f32 %v334, %v334
  %v481 = vmul.f32 %v337, %v337
  %v482 = vmul.f32 %v339, %v339
  %v483 = vmul.f32 %v342, %v342
  %v484 = vmul.f32 %v344, %v344
  %v485 = vmul.f32 %v347, %v347
  %v486 = vmul.f32 %v349, %v349
  %v487 = vmul.f32 %v352, %v352
  %v488 = vmul.f32 %v354, %v354
  %v489 = vmul.f32 %v357, %v357
  %v490 = vmul.f32 %v359, %v359
  %v491 = vmul.f32 %v362, %v362
  %v492 = vmul.f32 %v364, %v364
  %v493 = vmul.f32 %v367, %v367
  %v494 = vmul.f32 %v369, %v369
  %v495 = vmul.f32 %v372, %v372
  %v496 = vmul.f32 %v374, %v374
  %v497 = vmul.f32 %v377, %v377
  %v498 = vmul.f32 %v379, %v379
  %v499 = vmul.f32 %v382, %v382
  %v500 = vmul.f32 %v384, %v384
  %v501 = vmul.f32 %v387, %v387
  %v502 = vmul.f32 %v389, %v389
  %v503 = vmul.f32 %v392, %v392
  %v504 = vmul.f32 %v394, %v394
  %v505 = vmul.f32 %v397, %v397
  %v506 = vmul.f32 %v399, %v399
  %v507 = vmul.f32 %v402, %v402
  %v508 = vadd.f32 %v459, %v460
  %v509 = vadd.f32 %v508, %v461
  %v510 = vadd.f32 %v509, %v462
  %v511 = vadd.f32 %v510, %v463
  %v512 = vadd.f32 %v511, %v464
  %v513 = vadd.f32 %v512, %v465
  %v514 = vadd.f32 %v513, %v466
  %v515 = vadd.f32 %v514, %v467
  %v516 = vadd.f32 %v515, %v468
  %v517 = vadd.f32 %v516, %v469
  %v518 = vadd.f32 %v517, %v470
  %v519 = vadd.f32 %v518, %v471
  %v520 = vadd.f32 %v519, %v472
  %v521 = vadd.f32 %v520, %v473
  %v522 = vadd.f32 %v521, %v474
  %v523 = vadd.f32 %v522, %v475
  %v524 = vadd.f32 %v523, %v476
  %v525 = vadd.f32 %v524, %v477
  %v526 = vadd.f32 %v525, %v478
  %v527 = vadd.f32 %v526, %v479
  %v528 = vadd.f32 %v527, %v480
  %v529 = vadd.f32 %v528, %v481
  %v530 = vadd.f32 %v529, %v482
  %v531 = vadd.f32 %v530, %v483
  %v532 = vadd.f32 %v531, %v484
  %v533 = vadd.f32 %v532, %v485
  %v534 = vadd.f32 %v533, %v486
  %v535 = vadd.f32 %v534, %v487
  %v536 = vadd.f32 %v535, %v488
  %v537 = vadd.f32 %v536, %v489
  %v538 = vadd.f32 %v537, %v490
  %v539 = vadd.f32 %v538, %v491
  %v540 = vadd.f32 %v539, %v492
  %v541 = vadd.f32 %v540, %v493
  %v542 = vadd.f32 %v541, %v494
  %v543 = vadd.f32 %v542, %v495
  %v544 = vadd.f32 %v543, %v496
  %v545 = vadd.f32 %v544, %v497
  %v546 = vadd.f32 %v545, %v498
  %v547 = vadd.f32 %v546, %v499
  %v548 = vadd.f32 %v547, %v500
  %v549 = vadd.f32 %v548, %v501
  %v550 = vadd.f32 %v549, %v502
  %v551 = vadd.f32 %v550, %v503
  %v552 = vadd.f32 %v551, %v504
  %v553 = vadd.f32 %v552, %v505
  %v554 = vadd.f32 %v553, %v506
  %v555 = vadd.f32 %v554, %v507
  %v556 = vrot.slane %v555, 4
  %v557 = vadd.f32 %v555, %v556
  %v558 = vrot.slane %v557, 2
  %v559 = vadd.f32 %v557, %v558
  %v560 = vrot.slane %v559, 1
  %v561 = vadd.f32 %v559, %v560
  %vm562 = vcmask 1040384
  %v563 = vsel %vm562, %v458, %v561
  %564 = vst [vmem:[%s2] sm:$0x3] %v563
  // Predicated region
  $region10: #{conv2d_bn_relu.2} parent=0 // pred_check
    _
  $region11: #{conv2d_bn_relu.2} parent=0 // pred_check_branch
    %566 = sbr.rel (0) target = $region13
  $region12: #{conv2d_bn_relu.2} parent=0 // pred_region
    _
  $region13: #{conv2d_bn_relu.2} parent=0 // pred_fallthru
    _
  // Predicated region
  $region14: #{conv2d_bn_relu.2} parent=0 // pred_check
    _
  $region15: #{conv2d_bn_relu.2} parent=0 // pred_check_branch
    %568 = sbr.rel (0) target = $region17
  $region16: #{conv2d_bn_relu.2} parent=0 // pred_region
    _
  $region17: #{conv2d_bn_relu.2} parent=0 // pred_fallthru
    _

// kernel: conv2d_bn_relu.3
$region0: #{conv2d_bn_relu.3}
  #allocation0 [shape = 'u32[]', space=smem, size = 0x4, offset = 0x4, fixed_abs, tag = 'smem constant byte address 0x4 - core index']
  #allocation1 [shape = 'u32[72,128]{1,0:T(1,128)}', space=vmem, size = 0x9000, scoped, tag = 'internal scratch']
  %s0 = inlined_call_operand.vmem [shape: bf16[392,128], index: 0, kind: input, shape index: {}]
  %s1 = inlined_call_operand.vmem [shape: bf16[128,128], index: 1, kind: input, shape index: {}]
  %s2 = inlined_call_operand.vmem [shape: f32[1,128], index: 2, kind: input, shape index: {}]
  %s3 = inlined_call_operand.vmem [shape: f32[1,128], index: 3, kind: input, shape index: {}]
  %s4 = inlined_call_operand.vmem [shape: f32[392,128], index: 4, kind: output, shape index: {}]
  %s5 = sld [smem:[#allocation0]]
  $region26: #{conv2d_bn_relu.3} parent=0
    _
  %s7 = ssub.s32 1, %s5
  %s8 = scalar_select 0, %s7, %s5
  // Predicated region
  $region2: #{conv2d_bn_relu.3} parent=0 // pred_check
    _
  $region3: #{conv2d_bn_relu.3} parent=0 // pred_check_branch
    %10 = sbr.rel (0) target = $region5
  $region4: #{conv2d_bn_relu.3} parent=0 // pred_region
    _
  $region5: #{conv2d_bn_relu.3} parent=0 // pred_fallthru
    _
  // Predicated region
  $region6: #{conv2d_bn_relu.3} parent=0 // pred_check
    _
  $region7: #{conv2d_bn_relu.3} parent=0 // pred_check_branch
    %12 = sbr.rel (0) target = $region9
  $region8: #{conv2d_bn_relu.3} parent=0 // pred_region
    _
  $region9: #{conv2d_bn_relu.3} parent=0 // pred_fallthru
    _
  // Predicated region
  $region10: #{conv2d_bn_relu.3} parent=0 // pred_check
    _
  $region11: #{conv2d_bn_relu.3} parent=0 // pred_check_branch
    %14 = sbr.rel (0) target = $region13
  $region12: #{conv2d_bn_relu.3} parent=0 // pred_region
    _
  $region13: #{conv2d_bn_relu.3} parent=0 // pred_fallthru
    _
  // Predicated region
  $region14: #{conv2d_bn_relu.3} parent=0 // pred_check
    _
  $region15: #{conv2d_bn_relu.3} parent=0 // pred_check_branch
    %16 = sbr.rel (0) target = $region17
  $region16: #{conv2d_bn_relu.3} parent=0 // pred_region
    _
  $region17: #{conv2d_bn_relu.3} parent=0 // pred_fallthru
    _
  %v17 = vld [vmem:[%s0] sm:$0xf]
  %v18 = vld [vmem:[%s0 + $0x4] sm:$0xf]
  %v19 = vld [vmem:[%s0 + $0x8] sm:$0xf]
  %v20 = vld [vmem:[%s0 + $0xc] sm:$0xf]
  %v21 = vld [vmem:[%s0 + $0x10] sm:$0xf]
  %v22 = vld [vmem:[%s0 + $0x14] sm:$0xf]
  %v23 = vld [vmem:[%s0 + $0x18] sm:$0xf]
  %v24 = vld [vmem:[%s0 + $0x1c] sm:$0xf]
  %v25 = vld [vmem:[%s0 + $0x20] sm:$0xf]
  %v26 = vld [vmem:[%s0 + $0x24] sm:$0xf]
  %v27 = vld [vmem:[%s0 + $0x28] sm:$0xf]
  %v28 = vld [vmem:[%s0 + $0x2c] sm:$0xf]
  %v29 = vld [vmem:[%s0 + $0x30] sm:$0xf]
  %v30 = vld [vmem:[%s0 + $0x34] sm:$0xf]
  %v31 = vld [vmem:[%s0 + $0x38] sm:$0xf]
  %v32 = vld [vmem:[%s0 + $0x3c] sm:$0xf]
  %v33 = vld [vmem:[%s0 + $0x40] sm:$0xf]
  %v34 = vld [vmem:[%s0 + $0x44] sm:$0xf]
  %v35 = vld [vmem:[%s0 + $0x48] sm:$0xf]
  %v36 = vld [vmem:[%s0 + $0x4c] sm:$0xf]
  %v37 = vld [vmem:[%s0 + $0x50] sm:$0xf]
  %v38 = vld [vmem:[%s0 + $0x54] sm:$0xf]
  %v39 = vld [vmem:[%s0 + $0x58] sm:$0xf]
  %v40 = vld [vmem:[%s0 + $0x5c] sm:$0xf]
  %v41 = vld [vmem:[%s0 + $0x60] sm:$0xf]
  %v42 = vld [vmem:[%s0 + $0x64] sm:$0xf]
  %v43 = vld [vmem:[%s0 + $0x68] sm:$0xf]
  %v44 = vld [vmem:[%s0 + $0x6c] sm:$0xf]
  %v45 = vld [vmem:[%s0 + $0x70] sm:$0xf]
  %v46 = vld [vmem:[%s0 + $0x74] sm:$0xf]
  %v47 = vld [vmem:[%s0 + $0x78] sm:$0xf]
  %v48 = vld [vmem:[%s0 + $0x7c] sm:$0xf]
  %v49 = vld [vmem:[%s0 + $0x80] sm:$0xf]
  %v50 = vld [vmem:[%s0 + $0x84] sm:$0xf]
  %v51 = vld [vmem:[%s0 + $0x88] sm:$0xf]
  %v52 = vld [vmem:[%s0 + $0x8c] sm:$0xf]
  %v53 = vld [vmem:[%s0 + $0x90] sm:$0xf]
  %v54 = vld [vmem:[%s0 + $0x94] sm:$0xf]
  %v55 = vld [vmem:[%s0 + $0x98] sm:$0xf]
  %v56 = vld [vmem:[%s0 + $0x9c] sm:$0xf]
  %v57 = vld [vmem:[%s0 + $0xa0] sm:$0xf]
  %v58 = vld [vmem:[%s0 + $0xa4] sm:$0xf]
  %v59 = vld [vmem:[%s0 + $0xa8] sm:$0xf]
  %v60 = vld [vmem:[%s0 + $0xac] sm:$0xf]
  %v61 = vld [vmem:[%s0 + $0xb0] sm:$0xf]
  %v62 = vld [vmem:[%s0 + $0xb4] sm:$0xf]
  %v63 = vld [vmem:[%s0 + $0xb8] sm:$0xf]
  %v64 = vld [vmem:[%s0 + $0xbc] sm:$0xf]
  %v65 = vld [vmem:[%s0 + $0xc0] sm:$0xf]
  %v66 = vld [vmem:[%s1] sm:$0xf]
  %v67 = vld [vmem:[%s1 + $0x4] sm:$0xf]
  %v68 = vld [vmem:[%s1 + $0x8] sm:$0xf]
  %v69 = vld [vmem:[%s1 + $0xc] sm:$0xf]
  %v70 = vld [vmem:[%s1 + $0x10] sm:$0xf]
  %v71 = vld [vmem:[%s1 + $0x14] sm:$0xf]
  %v72 = vld [vmem:[%s1 + $0x18] sm:$0xf]
  %v73 = vld [vmem:[%s1 + $0x1c] sm:$0xf]
  %v74 = vld [vmem:[%s1 + $0x20] sm:$0xf]
  %v75 = vld [vmem:[%s1 + $0x24] sm:$0xf]
  %v76 = vld [vmem:[%s1 + $0x28] sm:$0xf]
  %v77 = vld [vmem:[%s1 + $0x2c] sm:$0xf]
  %v78 = vld [vmem:[%s1 + $0x30] sm:$0xf]
  %v79 = vld [vmem:[%s1 + $0x34] sm:$0xf]
  %v80 = vld [vmem:[%s1 + $0x38] sm:$0xf]
  %v81 = vld [vmem:[%s1 + $0x3c] sm:$0xf]
  %v131 = vunpack.c.l.b16 %v17
  %v132 = vunpack.c.l.b16 %v18
  %v133 = vunpack.c.l.b16 %v19
  %v134 = vunpack.c.l.b16 %v20
  %v135 = vunpack.c.l.b16 %v21
  %v136 = vunpack.c.l.b16 %v22
  %v137 = vunpack.c.l.b16 %v23
  %v138 = vunpack.c.l.b16 %v24
  %v139 = vunpack.c.l.b16 %v25
  %v140 = vunpack.c.l.b16 %v26
  %v141 = vunpack.c.l.b16 %v27
  %v142 = vunpack.c.l.b16 %v28
  %v143 = vunpack.c.l.b16 %v29
  %v144 = vunpack.c.l.b16 %v30
  %v145 = vunpack.c.l.b16 %v31
  %v146 = vunpack.c.l.b16 %v32
  %v147 = vunpack.c.l.b16 %v33
  %v148 = vunpack.c.l.b16 %v34
  %v149 = vunpack.c.l.b16 %v35
  %v150 = vunpack.c.l.b16 %v36
  %v151 = vunpack.c.l.b16 %v37
  %v152 = vunpack.c.l.b16 %v38
  %v153 = vunpack.c.l.b16 %v39
  %v154 = vunpack.c.l.b16 %v40
  %v155 = vunpack.c.l.b16 %v41
  %v156 = vunpack.c.l.b16 %v42
  %v157 = vunpack.c.l.b16 %v43
  %v158 = vunpack.c.l.b16 %v44
  %v159 = vunpack.c.l.b16 %v45
  %v160 = vunpack.c.l.b16 %v46
  %v161 = vunpack.c.l.b16 %v47
  %v162 = vunpack.c.l.b16 %v48
  %v163 = vunpack.c.l.b16 %v49
  %v164 = vunpack.c.l.b16 %v50
  %v165 = vunpack.c.l.b16 %v51
  %v166 = vunpack.c.l.b16 %v52
  %v167 = vunpack.c.l.b16 %v53
  %v168 = vunpack.c.l.b16 %v54
  %v169 = vunpack.c.l.b16 %v55
  %v170 = vunpack.c.l.b16 %v56
  %v171 = vunpack.c.l.b16 %v57
  %v172 = vunpack.c.l.b16 %v58
  %v173 = vunpack.c.l.b16 %v59
  %v174 = vunpack.c.l.b16 %v60
  %v175 = vunpack.c.l.b16 %v61
  %v176 = vunpack.c.l.b16 %v62
  %v177 = vunpack.c.l.b16 %v63
  %v178 = vunpack.c.l.b16 %v64
  %v179 = vunpack.c.l.b16 %v65
  %v180 = vpack.c.b16 %v132, %v131
  %v181 = vpack.c.b16 %v134, %v133
  %v182 = vpack.c.b16 %v136, %v135
  %v183 = vpack.c.b16 %v138, %v137
  %v184 = vpack.c.b16 %v140, %v139
  %v185 = vpack.c.b16 %v142, %v141
  %v186 = vpack.c.b16 %v144, %v143
  %v187 = vpack.c.b16 %v146, %v145
  %v188 = vpack.c.b16 %v148, %v147
  %v189 = vpack.c.b16 %v150, %v149
  %v190 = vpack.c.b16 %v152, %v151
  %v191 = vpack.c.b16 %v154, %v153
  %v192 = vpack.c.b16 %v156, %v155
  %v193 = vpack.c.b16 %v158, %v157
  %v194 = vpack.c.b16 %v160, %v159
  %v195 = vpack.c.b16 %v162, %v161
  %v196 = vpack.c.b16 %v164, %v163
  %v197 = vpack.c.b16 %v166, %v165
  %v198 = vpack.c.b16 %v168, %v167
  %v199 = vpack.c.b16 %v170, %v169
  %v200 = vpack.c.b16 %v172, %v171
  %v201 = vpack.c.b16 %v174, %v173
  %v202 = vpack.c.b16 %v176, %v175
  %v203 = vpack.c.b16 %v178, %v177
  %v204 = vpack.c.b16 %v179, %v179
  %v246 = vunpack.c.l.b16 %v66
  %v247 = vunpack.c.l.b16 %v67
  %v248 = vunpack.c.l.b16 %v68
  %v249 = vunpack.c.l.b16 %v69
  %v250 = vunpack.c.l.b16 %v70
  %v251 = vunpack.c.l.b16 %v71
  %v252 = vunpack.c.l.b16 %v72
  %v253 = vunpack.c.l.b16 %v73
  %v254 = vunpack.c.l.b16 %v74
  %v255 = vunpack.c.l.b16 %v75
  %v256 = vunpack.c.l.b16 %v76
  %v257 = vunpack.c.l.b16 %v77
  %v258 = vunpack.c.l.b16 %v78
  %v259 = vunpack.c.l.b16 %v79
  %v260 = vunpack.c.l.b16 %v80
  %v261 = vunpack.c.l.b16 %v81
  %v262 = vpack.c.b16 %v247, %v246
  %v263 = vpack.c.b16 %v249, %v248
  %v264 = vpack.c.b16 %v251, %v250
  %v265 = vpack.c.b16 %v253, %v252
  %v266 = vpack.c.b16 %v255, %v254
  %v267 = vpack.c.b16 %v257, %v256
  %v268 = vpack.c.b16 %v259, %v258
  %v269 = vpack.c.b16 %v261, %v260
  %278 = vmatpush.bf16.msra.mxu0 %v269
  %279 = vmatpush.bf16.msra.mxu0 %v268
  %280 = vmatpush.bf16.msra.mxu0 %v267
  %281 = vmatpush.bf16.msra.mxu0 %v266
  %282 = vmatpush.bf16.msra.mxu0 %v265
  %283 = vmatpush.bf16.msra.mxu0 %v264
  %284 = vmatpush.bf16.msra.mxu0 %v263
  %285 = vmatpush.bf16.msra.mxu0 %v262
  %286 = vmatmul.bf16.gmra.mxu0 %v180
  %v287 = vpop.f32.mrf.mxu0
  %v288 = vadd.f32 0.0, %v287
  %v289 = vpop.f32.mrf.mxu0
  %v290 = vadd.f32 0.0, %v289
  %291 = vmatmul.bf16.gmra.mxu0 %v181
  %v292 = vpop.f32.mrf.mxu0
  %v293 = vadd.f32 0.0, %v292
  %v294 = vpop.f32.mrf.mxu0
  %v295 = vadd.f32 0.0, %v294
  %296 = vmatmul.bf16.gmra.mxu0 %v182
  %v297 = vpop.f32.mrf.mxu0
  %v298 = vadd.f32 0.0, %v297
  %v299 = vpop.f32.mrf.mxu0
  %v300 = vadd.f32 0.0, %v299
  %301 = vmatmul.bf16.gmra.mxu0 %v183
  %v302 = vpop.f32.mrf.mxu0
  %v303 = vadd.f32 0.0, %v302
  %v304 = vpop.f32.mrf.mxu0
  %v305 = vadd.f32 0.0, %v304
  %306 = vmatmul.bf16.gmra.mxu0 %v184
  %v307 = vpop.f32.mrf.mxu0
  %v308 = vadd.f32 0.0, %v307
  %v309 = vpop.f32.mrf.mxu0
  %v310 = vadd.f32 0.0, %v309
  %311 = vmatmul.bf16.gmra.mxu0 %v185
  %v312 = vpop.f32.mrf.mxu0
  %v313 = vadd.f32 0.0, %v312
  %v314 = vpop.f32.mrf.mxu0
  %v315 = vadd.f32 0.0, %v314
  %316 = vmatmul.bf16.gmra.mxu0 %v186
  %v317 = vpop.f32.mrf.mxu0
  %v318 = vadd.f32 0.0, %v317
  %v319 = vpop.f32.mrf.mxu0
  %v320 = vadd.f32 0.0, %v319
  %321 = vmatmul.bf16.gmra.mxu0 %v187
  %v322 = vpop.f32.mrf.mxu0
  %v323 = vadd.f32 0.0, %v322
  %v324 = vpop.f32.mrf.mxu0
  %v325 = vadd.f32 0.0, %v324
  %326 = vmatmul.bf16.gmra.mxu0 %v188
  %v327 = vpop.f32.mrf.mxu0
  %v328 = vadd.f32 0.0, %v327
  %v329 = vpop.f32.mrf.mxu0
  %v330 = vadd.f32 0.0, %v329
  %331 = vmatmul.bf16.gmra.mxu0 %v189
  %v332 = vpop.f32.mrf.mxu0
  %v333 = vadd.f32 0.0, %v332
  %v334 = vpop.f32.mrf.mxu0
  %v335 = vadd.f32 0.0, %v334
  %336 = vmatmul.bf16.gmra.mxu0 %v190
  %v337 = vpop.f32.mrf.mxu0
  %v338 = vadd.f32 0.0, %v337
  %v339 = vpop.f32.mrf.mxu0
  %v340 = vadd.f32 0.0, %v339
  %341 = vmatmul.bf16.gmra.mxu0 %v191
  %v342 = vpop.f32.mrf.mxu0
  %v343 = vadd.f32 0.0, %v342
  %v344 = vpop.f32.mrf.mxu0
  %v345 = vadd.f32 0.0, %v344
  %346 = vmatmul.bf16.gmra.mxu0 %v192
  %v347 = vpop.f32.mrf.mxu0
  %v348 = vadd.f32 0.0, %v347
  %v349 = vpop.f32.mrf.mxu0
  %v350 = vadd.f32 0.0, %v349
  %351 = vmatmul.bf16.gmra.mxu0 %v193
  %v352 = vpop.f32.mrf.mxu0
  %v353 = vadd.f32 0.0, %v352
  %v354 = vpop.f32.mrf.mxu0
  %v355 = vadd.f32 0.0, %v354
  %356 = vmatmul.bf16.gmra.mxu0 %v194
  %v357 = vpop.f32.mrf.mxu0
  %v358 = vadd.f32 0.0, %v357
  %v359 = vpop.f32.mrf.mxu0
  %v360 = vadd.f32 0.0, %v359
  %361 = vmatmul.bf16.gmra.mxu0 %v195
  %v362 = vpop.f32.mrf.mxu0
  %v363 = vadd.f32 0.0, %v362
  %v364 = vpop.f32.mrf.mxu0
  %v365 = vadd.f32 0.0, %v364
  %366 = vmatmul.bf16.gmra.mxu0 %v196
  %v367 = vpop.f32.mrf.mxu0
  %v368 = vadd.f32 0.0, %v367
  %v369 = vpop.f32.mrf.mxu0
  %v370 = vadd.f32 0.0, %v369
  %371 = vmatmul.bf16.gmra.mxu0 %v197
  %v372 = vpop.f32.mrf.mxu0
  %v373 = vadd.f32 0.0, %v372
  %v374 = vpop.f32.mrf.mxu0
  %v375 = vadd.f32 0.0, %v374
  %376 = vmatmul.bf16.gmra.mxu0 %v198
  %v377 = vpop.f32.mrf.mxu0
  %v378 = vadd.f32 0.0, %v377
  %v379 = vpop.f32.mrf.mxu0
  %v380 = vadd.f32 0.0, %v379
  %381 = vmatmul.bf16.gmra.mxu0 %v199
  %v382 = vpop.f32.mrf.mxu0
  %v383 = vadd.f32 0.0, %v382
  %v384 = vpop.f32.mrf.mxu0
  %v385 = vadd.f32 0.0, %v384
  %386 = vmatmul.bf16.gmra.mxu0 %v200
  %v387 = vpop.f32.mrf.mxu0
  %v388 = vadd.f32 0.0, %v387
  %v389 = vpop.f32.mrf.mxu0
  %v390 = vadd.f32 0.0, %v389
  %391 = vmatmul.bf16.gmra.mxu0 %v201
  %v392 = vpop.f32.mrf.mxu0
  %v393 = vadd.f32 0.0, %v392
  %v394 = vpop.f32.mrf.mxu0
  %v395 = vadd.f32 0.0, %v394
  %396 = vmatmul.bf16.gmra.mxu0 %v202
  %v397 = vpop.f32.mrf.mxu0
  %v398 = vadd.f32 0.0, %v397
  %v399 = vpop.f32.mrf.mxu0
  %v400 = vadd.f32 0.0, %v399
  %401 = vmatmul.bf16.gmra.mxu0 %v203
  %v402 = vpop.f32.mrf.mxu0
  %v403 = vadd.f32 0.0, %v402
  %v404 = vpop.f32.mrf.mxu0
  %v405 = vadd.f32 0.0, %v404
  %406 = vmatmul.bf16.gmra.mxu0 %v204
  %v407 = vpop.f32.mrf.mxu0
  %v408 = vadd.f32 0.0, %v407
  %v409 = vpop.f32.mrf.mxu0
  %410 = vdwg.mxu0
  %v411 = vld [vmem:[%s2] sm:$0x1]
  %v413 = vperm.slane %v411, 0
  %v415 = vmul.f32 %v288, %v413
  %v416 = vmul.f32 %v290, %v413
  %v417 = vmul.f32 %v293, %v413
  %v418 = vmul.f32 %v295, %v413
  %v419 = vmul.f32 %v298, %v413
  %v420 = vmul.f32 %v300, %v413
  %v421 = vmul.f32 %v303, %v413
  %v422 = vmul.f32 %v305, %v413
  %v423 = vmul.f32 %v308, %v413
  %v424 = vmul.f32 %v310, %v413
  %v425 = vmul.f32 %v313, %v413
  %v426 = vmul.f32 %v315, %v413
  %v427 = vmul.f32 %v318, %v413
  %v428 = vmul.f32 %v320, %v413
  %v429 = vmul.f32 %v323, %v413
  %v430 = vmul.f32 %v325, %v413
  %v431 = vmul.f32 %v328, %v413
  %v432 = vmul.f32 %v330, %v413
  %v433 = vmul.f32 %v333, %v413
  %v434 = vmul.f32 %v335, %v413
  %v435 = vmul.f32 %v338, %v413
  %v436 = vmul.f32 %v340, %v413
  %v437 = vmul.f32 %v343, %v413
  %v438 = vmul.f32 %v345, %v413
  %v439 = vmul.f32 %v348, %v413
  %v440 = vmul.f32 %v350, %v413
  %v441 = vmul.f32 %v353, %v413
  %v442 = vmul.f32 %v355, %v413
  %v443 = vmul.f32 %v358, %v413
  %v444 = vmul.f32 %v360, %v413
  %v445 = vmul.f32 %v363, %v413
  %v446 = vmul.f32 %v365, %v413
  %v447 = vmul.f32 %v368, %v413
  %v448 = vmul.f32 %v370, %v413
  %v449 = vmul.f32 %v373, %v413
  %v450 = vmul.f32 %v375, %v413
  %v451 = vmul.f32 %v378, %v413
  %v452 = vmul.f32 %v380, %v413
  %v453 = vmul.f32 %v383, %v413
  %v454 = vmul.f32 %v385, %v413
  %v455 = vmul.f32 %v388, %v413
  %v456 = vmul.f32 %v390, %v413
  %v457 = vmul.f32 %v393, %v413
  %v458 = vmul.f32 %v395, %v413
  %v459 = vmul.f32 %v398, %v413
  %v460 = vmul.f32 %v400, %v413
  %v461 = vmul.f32 %v403, %v413
  %v462 = vmul.f32 %v405, %v413
  %v463 = vmul.f32 %v408, %v413
  %v464 = vld [vmem:[%s3] sm:$0x1]
  %v466 = vperm.slane %v464, 0
  %v468 = vadd.f32 %v415, %v466
  %v469 = vadd.f32 %v416, %v466
  %v470 = vadd.f32 %v417, %v466
  %v471 = vadd.f32 %v418, %v466
  %v472 = vadd.f32 %v419, %v466
  %v473 = vadd.f32 %v420, %v466
  %v474 = vadd.f32 %v421, %v466
  %v475 = vadd.f32 %v422, %v466
  %v476 = vadd.f32 %v423, %v466
  %v477 = vadd.f32 %v424, %v466
  %v478 = vadd.f32 %v425, %v466
  %v479 = vadd.f32 %v426, %v466
  %v480 = vadd.f32 %v427, %v466
  %v481 = vadd.f32 %v428, %v466
  %v482 = vadd.f32 %v429, %v466
  %v483 = vadd.f32 %v430, %v466
  %v484 = vadd.f32 %v431, %v466
  %v485 = vadd.f32 %v432, %v466
  %v486 = vadd.f32 %v433, %v466
  %v487 = vadd.f32 %v434, %v466
  %v488 = vadd.f32 %v435, %v466
  %v489 = vadd.f32 %v436, %v466
  %v490 = vadd.f32 %v437, %v466
  %v491 = vadd.f32 %v438, %v466
  %v492 = vadd.f32 %v439, %v466
  %v493 = vadd.f32 %v440, %v466
  %v494 = vadd.f32 %v441, %v466
  %v495 = vadd.f32 %v442, %v466
  %v496 = vadd.f32 %v443, %v466
  %v497 = vadd.f32 %v444, %v466
  %v498 = vadd.f32 %v445, %v466
  %v499 = vadd.f32 %v446, %v466
  %v500 = vadd.f32 %v447, %v466
  %v501 = vadd.f32 %v448, %v466
  %v502 = vadd.f32 %v449, %v466
  %v503 = vadd.f32 %v450, %v466
  %v504 = vadd.f32 %v451, %v466
  %v505 = vadd.f32 %v452, %v466
  %v506 = vadd.f32 %v453, %v466
  %v507 = vadd.f32 %v454, %v466
  %v508 = vadd.f32 %v455, %v466
  %v509 = vadd.f32 %v456, %v466
  %v510 = vadd.f32 %v457, %v466
  %v511 = vadd.f32 %v458, %v466
  %v512 = vadd.f32 %v459, %v466
  %v513 = vadd.f32 %v460, %v466
  %v514 = vadd.f32 %v461, %v466
  %v515 = vadd.f32 %v462, %v466
  %v516 = vadd.f32 %v463, %v466
  %v517 = vmax.f32 %v468, 0.0
  %v518 = vmax.f32 %v469, 0.0
  %v519 = vmax.f32 %v470, 0.0
  %v520 = vmax.f32 %v471, 0.0
  %v521 = vmax.f32 %v472, 0.0
  %v522 = vmax.f32 %v473, 0.0
  %v523 = vmax.f32 %v474, 0.0
  %v524 = vmax.f32 %v475, 0.0
  %v525 = vmax.f32 %v476, 0.0
  %v526 = vmax.f32 %v477, 0.0
  %v527 = vmax.f32 %v478, 0.0
  %v528 = vmax.f32 %v479, 0.0
  %v529 = vmax.f32 %v480, 0.0
  %v530 = vmax.f32 %v481, 0.0
  %v531 = vmax.f32 %v482, 0.0
  %v532 = vmax.f32 %v483, 0.0
  %v533 = vmax.f32 %v484, 0.0
  %v534 = vmax.f32 %v485, 0.0
  %v535 = vmax.f32 %v486, 0.0
  %v536 = vmax.f32 %v487, 0.0
  %v537 = vmax.f32 %v488, 0.0
  %v538 = vmax.f32 %v489, 0.0
  %v539 = vmax.f32 %v490, 0.0
  %v540 = vmax.f32 %v491, 0.0
  %v541 = vmax.f32 %v492, 0.0
  %v542 = vmax.f32 %v493, 0.0
  %v543 = vmax.f32 %v494, 0.0
  %v544 = vmax.f32 %v495, 0.0
  %v545 = vmax.f32 %v496, 0.0
  %v546 = vmax.f32 %v497, 0.0
  %v547 = vmax.f32 %v498, 0.0
  %v548 = vmax.f32 %v499, 0.0
  %v549 = vmax.f32 %v500, 0.0
  %v550 = vmax.f32 %v501, 0.0
  %v551 = vmax.f32 %v502, 0.0
  %v552 = vmax.f32 %v503, 0.0
  %v553 = vmax.f32 %v504, 0.0
  %v554 = vmax.f32 %v505, 0.0
  %v555 = vmax.f32 %v506, 0.0
  %v556 = vmax.f32 %v507, 0.0
  %v557 = vmax.f32 %v508, 0.0
  %v558 = vmax.f32 %v509, 0.0
  %v559 = vmax.f32 %v510, 0.0
  %v560 = vmax.f32 %v511, 0.0
  %v561 = vmax.f32 %v512, 0.0
  %v562 = vmax.f32 %v513, 0.0
  %v563 = vmax.f32 %v514, 0.0
  %v564 = vmax.f32 %v515, 0.0
  %v565 = vmax.f32 %v516, 0.0
  %566 = vst [vmem:[%s4] sm:$0xff] %v517
  %567 = vst [vmem:[%s4 + $0x8] sm:$0xff] %v518
  %568 = vst [vmem:[%s4 + $0x10] sm:$0xff] %v519
  %569 = vst [vmem:[%s4 + $0x18] sm:$0xff] %v520
  %570 = vst [vmem:[%s4 + $0x20] sm:$0xff] %v521
  %571 = vst [vmem:[%s4 + $0x28] sm:$0xff] %v522
  %572 = vst [vmem:[%s4 + $0x30] sm:$0xff] %v523
  %573 = vst [vmem:[%s4 + $0x38] sm:$0xff] %v524
  %574 = vst [vmem:[%s4 + $0x40] sm:$0xff] %v525
  %575 = vst [vmem:[%s4 + $0x48] sm:$0xff] %v526
  %576 = vst [vmem:[%s4 + $0x50] sm:$0xff] %v527
  %577 = vst [vmem:[%s4 + $0x58] sm:$0xff] %v528
  %578 = vst [vmem:[%s4 + $0x60] sm:$0xff] %v529
  %579 = vst [vmem:[%s4 + $0x68] sm:$0xff] %v530
  %580 = vst [vmem:[%s4 + $0x70] sm:$0xff] %v531
  %581 = vst [vmem:[%s4 + $0x78] sm:$0xff] %v532
  %582 = vst [vmem:[%s4 + $0x80] sm:$0xff] %v533
  %583 = vst [vmem:[%s4 + $0x88] sm:$0xff] %v534
  %584 = vst [vmem:[%s4 + $0x90] sm:$0xff] %v535
  %585 = vst [vmem:[%s4 + $0x98] sm:$0xff] %v536
  %586 = vst [vmem:[%s4 + $0xa0] sm:$0xff] %v537
  %587 = vst [vmem:[%s4 + $0xa8] sm:$0xff] %v538
  %588 = vst [vmem:[%s4 + $0xb0] sm:$0xff] %v539
  %589 = vst [vmem:[%s4 + $0xb8] sm:$0xff] %v540
  %590 = vst [vmem:[%s4 + $0xc0] sm:$0xff] %v541
  %591 = vst [vmem:[%s4 + $0xc8] sm:$0xff] %v542
  %592 = vst [vmem:[%s4 + $0xd0] sm:$0xff] %v543
  %593 = vst [vmem:[%s4 + $0xd8] sm:$0xff] %v544
  %594 = vst [vmem:[%s4 + $0xe0] sm:$0xff] %v545
  %595 = vst [vmem:[%s4 + $0xe8] sm:$0xff] %v546
  %596 = vst [vmem:[%s4 + $0xf0] sm:$0xff] %v547
  %597 = vst [vmem:[%s4 + $0xf8] sm:$0xff] %v548
  %598 = vst [vmem:[%s4 + $0x100] sm:$0xff] %v549
  %599 = vst [vmem:[%s4 + $0x108] sm:$0xff] %v550
  %600 = vst [vmem:[%s4 + $0x110] sm:$0xff] %v551
  %601 = vst [vmem:[%s4 + $0x118] sm:$0xff] %v552
  %602 = vst [vmem:[%s4 + $0x120] sm:$0xff] %v553
  %603 = vst [vmem:[%s4 + $0x128] sm:$0xff] %v554
  %604 = vst [vmem:[%s4 + $0x130] sm:$0xff] %v555
  %605 = vst [vmem:[%s4 + $0x138] sm:$0xff] %v556
  %606 = vst [vmem:[%s4 + $0x140] sm:$0xff] %v557
  %607 = vst [vmem:[%s4 + $0x148] sm:$0xff] %v558
  %608 = vst [vmem:[%s4 + $0x150] sm:$0xff] %v559
  %609 = vst [vmem:[%s4 + $0x158] sm:$0xff] %v560
  %610 = vst [vmem:[%s4 + $0x160] sm:$0xff] %v561
  %611 = vst [vmem:[%s4 + $0x168] sm:$0xff] %v562
  %612 = vst [vmem:[%s4 + $0x170] sm:$0xff] %v563
  %613 = vst [vmem:[%s4 + $0x178] sm:$0xff] %v564
  %614 = vst [vmem:[%s4 + $0x180] sm:$0xff] %v565
  // Predicated region
  $region18: #{conv2d_bn_relu.3} parent=0 // pred_check
    _
  $region19: #{conv2d_bn_relu.3} parent=0 // pred_check_branch
    %616 = sbr.rel (0) target = $region21
  $region20: #{conv2d_bn_relu.3} parent=0 // pred_region
    _
  $region21: #{conv2d_bn_relu.3} parent=0 // pred_fallthru
    _
  // Predicated region
  $region22: #{conv2d_bn_relu.3} parent=0 // pred_check
    _
  $region23: #{conv2d_bn_relu.3} parent=0 // pred_check_branch
    %618 = sbr.rel (0) target = $region25
  $region24: #{conv2d_bn_relu.3} parent=0 // pred_region
    _
  $region25: #{conv2d_bn_relu.3} parent=0 // pred_fallthru
    _

</llo_original>
